<compile_context>
chip_gen: v7x
topology: tpu7x:2x2x1
jax: 0.10.0
libtpu: 0.0.40
codegen_flags: <defaults>
</compile_context>

<pallas_src>
import functools

import jax
import jax.numpy as jnp
from jax import lax
from jax.experimental import pallas as pl
from jax.experimental.pallas import tpu as pltpu

EPSILON = 1e-9


def _cdiv(a, b):
    return -(-a // b)


def _round_up(a, b):
    return _cdiv(a, b) * b


def _num_tensorcores():
    """2 on chips whose grid 'parallel' axes shard across TensorCores
    (v7x / v4 megacore); 1 on single-TC chips (v5e / v6e)."""
    try:
        kind = jax.devices()[0].device_kind.lower()
    except Exception:
        return 1
    return 2 if ("v7" in kind or "v4" in kind) else 1


def _gdl_sums_kernel(inp_ref, targ_ref, out_t_ref, out_ti_ref, out_x_ref,
                     acc_t, acc_ti, acc_x, *,
                     tile_s, total_s, s_tiles_total, split_axis, split_tiles):
    p = pl.program_id(0)   # parallel split (only >1 on 2-TC chips)
    n = pl.program_id(1)   # batch       (reduction)
    s = pl.program_id(2)   # spatial tile (reduction)

    is_first = jnp.logical_and(n == 0, s == 0)
    is_last = jnp.logical_and(n == pl.num_programs(1) - 1,
                              s == pl.num_programs(2) - 1)

    @pl.when(is_first)
    def _init():
        acc_t[...] = jnp.zeros_like(acc_t)
        acc_ti[...] = jnp.zeros_like(acc_ti)
        acc_x[...] = jnp.zeros_like(acc_x)

    x = inp_ref[0].astype(jnp.float32)    # (C, tile_s)
    t = targ_ref[0].astype(jnp.float32)   # (C, tile_s)

    def accumulate(xv, tv):
        # Per-step cross-lane reduce into tiny (C, 1) accumulators: the reduce
        # lands on the XLU slot; no full-width accumulator RMW traffic.
        acc_t[...] += jnp.sum(tv, axis=1, keepdims=True)
        acc_x[...] += jnp.sum(xv, axis=1, keepdims=True)
        acc_ti[...] += jnp.sum(tv * xv, axis=1, keepdims=True)

    ragged = (total_s % tile_s) != 0
    if ragged:
        if split_axis == "spatial":
            s_global = p * split_tiles + s
        else:
            s_global = s
        is_boundary = s_global == (s_tiles_total - 1)

        @pl.when(is_boundary)
        def _masked():
            # Mask BEFORE any arithmetic: OOB lanes of the boundary block
            # contain undefined data.
            lane = lax.broadcasted_iota(jnp.int32, x.shape, 1)
            valid = lane < (total_s - s_global * tile_s)
            accumulate(jnp.where(valid, x, 0.0), jnp.where(valid, t, 0.0))

        @pl.when(jnp.logical_not(is_boundary))
        def _unmasked():
            accumulate(x, t)
    else:
        accumulate(x, t)

    @pl.when(is_last)
    def _finalize():
        out_t_ref[0] = acc_t[...]    # (C, 1) sum(targ)
        out_ti_ref[0] = acc_ti[...]  # (C, 1) sum(targ * inp)
        out_x_ref[0] = acc_x[...]    # (C, 1) sum(inp)


def generalized_dice_loss(inp, targ, *, epsilon=EPSILON,
                          target_block_bytes=2 * 1024 * 1024):
    """inp, targ: (N, C, H, W). Returns scalar f32 loss (matches PyTorch module)."""
    assert inp.shape == targ.shape and inp.ndim == 4
    N, C, H, W = inp.shape
    S = H * W

    # Free reshapes — NCHW is already contiguous as (N, C, H*W).
    inp3 = inp.reshape(N, C, S)
    targ3 = targ.reshape(N, C, S)

    # Tile the spatial (lane) axis.  Size blocks on the PADDED VMEM footprint
    # (C rounded up to the sublane-tile multiple for the dtype) so that
    # 2 inputs x 2 buffers x block stays well within the scoped VMEM limit.
    itemsize = max(jnp.dtype(inp.dtype).itemsize, jnp.dtype(targ.dtype).itemsize)
    sub_mult = 8 * max(1, 4 // itemsize)          # 8 (f32), 16 (bf16), 32 (i8)
    c_pad = _round_up(C, sub_mult)
    tile_s = max(128, (target_block_bytes // (c_pad * itemsize)) // 128 * 128)
    tile_s = min(tile_s, _round_up(S, 128))
    s_tiles_total = _cdiv(S, tile_s)

    # Megacore split — only on 2-TC chips.  Prefer an exact batch split (no
    # duplicate tiles, no split-induced masking); else exact spatial split.
    n_cores = _num_tensorcores()
    split_axis = "none"
    n_split = 1
    batch_per_split = N
    split_tiles = s_tiles_total
    if n_cores >= 2:
        if N % 2 == 0:
            split_axis, n_split, batch_per_split = "batch", 2, N // 2
        elif s_tiles_total % 2 == 0:
            split_axis, n_split, split_tiles = "spatial", 2, s_tiles_total // 2

    if split_axis == "batch":
        def in_index_map(p, n, s):
            return (p * batch_per_split + n, 0, s)
    elif split_axis == "spatial":
        def in_index_map(p, n, s):
            return (n, 0, p * split_tiles + s)
    else:
        def in_index_map(p, n, s):
            return (n, 0, s)

    def out_index_map(p, n, s):
        return (p, 0, 0)

    kernel = functools.partial(
        _gdl_sums_kernel,
        tile_s=tile_s, total_s=S, s_tiles_total=s_tiles_total,
        split_axis=split_axis, split_tiles=split_tiles)

    out_sds = jax.ShapeDtypeStruct((n_split, C, 1), jnp.float32)

    sums_t, sums_ti, sums_x = pl.pallas_call(
        kernel,
        out_shape=(out_sds, out_sds, out_sds),
        grid_spec=pltpu.PrefetchScalarGridSpec(
            num_scalar_prefetch=0,
            grid=(n_split, batch_per_split, split_tiles),
            in_specs=[
                pl.BlockSpec((1, C, tile_s), in_index_map),
                pl.BlockSpec((1, C, tile_s), in_index_map),
            ],
            out_specs=[
                pl.BlockSpec((1, C, 1), out_index_map),
                pl.BlockSpec((1, C, 1), out_index_map),
                pl.BlockSpec((1, C, 1), out_index_map),
            ],
            scratch_shapes=[
                pltpu.VMEM((C, 1), jnp.float32),
                pltpu.VMEM((C, 1), jnp.float32),
                pltpu.VMEM((C, 1), jnp.float32),
            ],
        ),
        compiler_params=pltpu.CompilerParams(
            dimension_semantics=("parallel", "arbitrary", "arbitrary"),
            vmem_limit_bytes=32 * 1024 * 1024),
    )(inp3, targ3)

    # TODO(synk): for C far below the sublane tile (e.g. C=4 with bf16) a
    # sublane-dense (N*C, S) row layout would shave the remaining padding
    # overhead; with narrow accumulators the kernel is HBM-bound without it.

    # Tiny epilogue in plain JAX on (n_split, C) values.
    s_t = jnp.sum(sums_t, axis=(0, 2))    # (C,) sum(targ)
    s_ti = jnp.sum(sums_ti, axis=(0, 2))  # (C,) sum(targ * inp)
    s_x = jnp.sum(sums_x, axis=(0, 2))    # (C,) sum(inp)

    w = 1.0 / (s_t * s_t + epsilon)
    numerator = jnp.sum(w * s_ti)
    denominator = jnp.sum(w * (s_t + s_x))   # sum(t + x) = sum(t) + sum(x)
    dice = 2.0 * (numerator + epsilon) / (denominator + epsilon)
    return 1.0 - dice


def _reference(inp, targ, epsilon=EPSILON):
    # Pure-JAX reference mirroring the PyTorch forward.
    inp = jnp.transpose(inp, (0, 2, 3, 1))
    targ = jnp.transpose(targ, (0, 2, 3, 1))
    w = 1.0 / (jnp.sum(targ, axis=(0, 1, 2)) ** 2 + epsilon)
    numerator = jnp.sum(w * jnp.sum(targ * inp, axis=(0, 1, 2)))
    denominator = jnp.sum(w * jnp.sum(targ + inp, axis=(0, 1, 2)))
    dice = 2.0 * (numerator + epsilon) / (denominator + epsilon)
    return 1.0 - dice


if __name__ == "__main__":
    key = jax.random.PRNGKey(0)
    k1, k2 = jax.random.split(key)

    N, C, H, W = 2, 4, 16, 16
    # inp ~ softmax-like probabilities, targ ~ one-hot labels
    logits = jax.random.normal(k1, (N, C, H, W), dtype=jnp.float32)
    inp = jax.nn.softmax(logits, axis=1)
    labels = jax.random.randint(k2, (N, H, W), 0, C)
    targ = jnp.transpose(
        jax.nn.one_hot(labels, C, dtype=jnp.float32), (0, 3, 1, 2))

    loss = jax.jit(generalized_dice_loss)(inp, targ)
    loss = jax.block_until_ready(loss)

    ref = _reference(inp, targ)
    assert jnp.allclose(loss, ref, rtol=1e-5, atol=1e-6), (loss, ref)

    print("KERNEL_OK")
</pallas_src>

<mosaic_0001>
module attributes {stable_mosaic.version = 11 : i64} {
  func.func @_gdl_sums_kernel(%arg0: i32, %arg1: i32, %arg2: i32, %arg3: memref<1x4x256xf32, #tpu.memory_space<vmem>>, %arg4: memref<1x4x256xf32, #tpu.memory_space<vmem>>, %arg5: memref<1x4x1xf32, #tpu.memory_space<vmem>>, %arg6: memref<1x4x1xf32, #tpu.memory_space<vmem>>, %arg7: memref<1x4x1xf32, #tpu.memory_space<vmem>>, %arg8: memref<4x1xf32, #tpu.memory_space<vmem>>, %arg9: memref<4x1xf32, #tpu.memory_space<vmem>>, %arg10: memref<4x1xf32, #tpu.memory_space<vmem>>) attributes {dimension_semantics = [#tpu.dimension_semantics<parallel>, #tpu.dimension_semantics<arbitrary>, #tpu.dimension_semantics<arbitrary>], iteration_bounds = array<i64: 1, 2, 1>, scalar_prefetch = 0 : i64, scratch_operands = 3 : i64, tpu.core_type = #tpu.core_type<tc>, window_params = [{transform_indices = @transform_0, window_bounds = array<i64: 1, 4, 256>}, {transform_indices = @transform_1, window_bounds = array<i64: 1, 4, 256>}, {transform_indices = @transform_2, window_bounds = array<i64: 1, 4, 1>}, {transform_indices = @transform_3, window_bounds = array<i64: 1, 4, 1>}, {transform_indices = @transform_4, window_bounds = array<i64: 1, 4, 1>}]} {
    %c0_i32 = arith.constant 0 : i32
    %0 = arith.cmpi eq, %arg1, %c0_i32 : i32
    %c0_i32_0 = arith.constant 0 : i32
    %1 = arith.cmpi eq, %arg2, %c0_i32_0 : i32
    %2 = arith.andi %0, %1 : i1
    %c1_i32 = arith.constant 1 : i32
    %3 = arith.cmpi eq, %arg1, %c1_i32 : i32
    %c0_i32_1 = arith.constant 0 : i32
    %4 = arith.cmpi eq, %arg2, %c0_i32_1 : i32
    %5 = arith.andi %3, %4 : i1
    %6 = arith.extui %2 : i1 to i32
    %c0_i32_2 = arith.constant 0 : i32
    %7 = arith.cmpi ne, %6, %c0_i32_2 : i32
    scf.if %7 {
      %cst_23 = arith.constant 0.000000e+00 : f32
      %30 = vector.broadcast %cst_23 : f32 to vector<4x1xf32>
      %c0_24 = arith.constant 0 : index
      %c0_25 = arith.constant 0 : index
      %31 = vector.load %arg8[%c0_24, %c0_25] : memref<4x1xf32, #tpu.memory_space<vmem>>, vector<4x1xf32>
      tpu.vector_store %arg8[%c0_24, %c0_25], %30 {strides = array<i32>} : memref<4x1xf32, #tpu.memory_space<vmem>>, vector<4x1xf32>,
      %cst_26 = arith.constant 0.000000e+00 : f32
      %32 = vector.broadcast %cst_26 : f32 to vector<4x1xf32>
      %c0_27 = arith.constant 0 : index
      %c0_28 = arith.constant 0 : index
      %33 = vector.load %arg9[%c0_27, %c0_28] : memref<4x1xf32, #tpu.memory_space<vmem>>, vector<4x1xf32>
      tpu.vector_store %arg9[%c0_27, %c0_28], %32 {strides = array<i32>} : memref<4x1xf32, #tpu.memory_space<vmem>>, vector<4x1xf32>,
      %cst_29 = arith.constant 0.000000e+00 : f32
      %34 = vector.broadcast %cst_29 : f32 to vector<4x1xf32>
      %c0_30 = arith.constant 0 : index
      %c0_31 = arith.constant 0 : index
      %35 = vector.load %arg10[%c0_30, %c0_31] : memref<4x1xf32, #tpu.memory_space<vmem>>, vector<4x1xf32>
      tpu.vector_store %arg10[%c0_30, %c0_31], %34 {strides = array<i32>} : memref<4x1xf32, #tpu.memory_space<vmem>>, vector<4x1xf32>,
    } else {
    }
    %c0 = arith.constant 0 : index
    %c0_3 = arith.constant 0 : index
    %c0_4 = arith.constant 0 : index
    %8 = vector.load %arg3[%c0, %c0_3, %c0_4] : memref<1x4x256xf32, #tpu.memory_space<vmem>>, vector<1x4x256xf32>
    %9 = vector.shape_cast %8 : vector<1x4x256xf32> to vector<4x256xf32>
    %c0_5 = arith.constant 0 : index
    %c0_6 = arith.constant 0 : index
    %c0_7 = arith.constant 0 : index
    %10 = vector.load %arg4[%c0_5, %c0_6, %c0_7] : memref<1x4x256xf32, #tpu.memory_space<vmem>>, vector<1x4x256xf32>
    %11 = vector.shape_cast %10 : vector<1x4x256xf32> to vector<4x256xf32>
    %c0_8 = arith.constant 0 : index
    %c0_9 = arith.constant 0 : index
    %12 = vector.load %arg8[%c0_8, %c0_9] : memref<4x1xf32, #tpu.memory_space<vmem>>, vector<4x1xf32>
    %cst = arith.constant dense<0.000000e+00> : vector<4xf32>
    %13 = vector.multi_reduction <add>, %11, %cst [1] : vector<4x256xf32> to vector<4xf32>
    %14 = vector.shape_cast %13 : vector<4xf32> to vector<4x1xf32>
    %15 = arith.addf %12, %14 : vector<4x1xf32>
    %c0_10 = arith.constant 0 : index
    %c0_11 = arith.constant 0 : index
    %16 = vector.load %arg8[%c0_10, %c0_11] : memref<4x1xf32, #tpu.memory_space<vmem>>, vector<4x1xf32>
    tpu.vector_store %arg8[%c0_10, %c0_11], %15 {strides = array<i32>} : memref<4x1xf32, #tpu.memory_space<vmem>>, vector<4x1xf32>,
    %c0_12 = arith.constant 0 : index
    %c0_13 = arith.constant 0 : index
    %17 = vector.load %arg10[%c0_12, %c0_13] : memref<4x1xf32, #tpu.memory_space<vmem>>, vector<4x1xf32>
    %cst_14 = arith.constant dense<0.000000e+00> : vector<4xf32>
    %18 = vector.multi_reduction <add>, %9, %cst_14 [1] : vector<4x256xf32> to vector<4xf32>
    %19 = vector.shape_cast %18 : vector<4xf32> to vector<4x1xf32>
    %20 = arith.addf %17, %19 : vector<4x1xf32>
    %c0_15 = arith.constant 0 : index
    %c0_16 = arith.constant 0 : index
    %21 = vector.load %arg10[%c0_15, %c0_16] : memref<4x1xf32, #tpu.memory_space<vmem>>, vector<4x1xf32>
    tpu.vector_store %arg10[%c0_15, %c0_16], %20 {strides = array<i32>} : memref<4x1xf32, #tpu.memory_space<vmem>>, vector<4x1xf32>,
    %c0_17 = arith.constant 0 : index
    %c0_18 = arith.constant 0 : index
    %22 = vector.load %arg9[%c0_17, %c0_18] : memref<4x1xf32, #tpu.memory_space<vmem>>, vector<4x1xf32>
    %23 = arith.mulf %11, %9 : vector<4x256xf32>
    %cst_19 = arith.constant dense<0.000000e+00> : vector<4xf32>
    %24 = vector.multi_reduction <add>, %23, %cst_19 [1] : vector<4x256xf32> to vector<4xf32>
    %25 = vector.shape_cast %24 : vector<4xf32> to vector<4x1xf32>
    %26 = arith.addf %22, %25 : vector<4x1xf32>
    %c0_20 = arith.constant 0 : index
    %c0_21 = arith.constant 0 : index
    %27 = vector.load %arg9[%c0_20, %c0_21] : memref<4x1xf32, #tpu.memory_space<vmem>>, vector<4x1xf32>
    tpu.vector_store %arg9[%c0_20, %c0_21], %26 {strides = array<i32>} : memref<4x1xf32, #tpu.memory_space<vmem>>, vector<4x1xf32>,
    %28 = arith.extui %5 : i1 to i32
    %c0_i32_22 = arith.constant 0 : i32
    %29 = arith.cmpi ne, %28, %c0_i32_22 : i32
    scf.if %29 {
      %c0_23 = arith.constant 0 : index
      %c0_24 = arith.constant 0 : index
      %30 = vector.load %arg8[%c0_23, %c0_24] : memref<4x1xf32, #tpu.memory_space<vmem>>, vector<4x1xf32>
      %c0_25 = arith.constant 0 : index
      %c0_26 = arith.constant 0 : index
      %c0_27 = arith.constant 0 : index
      %31 = vector.load %arg5[%c0_25, %c0_26, %c0_27] : memref<1x4x1xf32, #tpu.memory_space<vmem>>, vector<1x4x1xf32>
      %32 = vector.shape_cast %31 : vector<1x4x1xf32> to vector<4x1xf32>
      %33 = vector.shape_cast %30 : vector<4x1xf32> to vector<1x4x1xf32>
      tpu.vector_store %arg5[%c0_25, %c0_26, %c0_27], %33 {strides = array<i32>} : memref<1x4x1xf32, #tpu.memory_space<vmem>>, vector<1x4x1xf32>,
      %c0_28 = arith.constant 0 : index
      %c0_29 = arith.constant 0 : index
      %34 = vector.load %arg9[%c0_28, %c0_29] : memref<4x1xf32, #tpu.memory_space<vmem>>, vector<4x1xf32>
      %c0_30 = arith.constant 0 : index
      %c0_31 = arith.constant 0 : index
      %c0_32 = arith.constant 0 : index
      %35 = vector.load %arg6[%c0_30, %c0_31, %c0_32] : memref<1x4x1xf32, #tpu.memory_space<vmem>>, vector<1x4x1xf32>
      %36 = vector.shape_cast %35 : vector<1x4x1xf32> to vector<4x1xf32>
      %37 = vector.shape_cast %34 : vector<4x1xf32> to vector<1x4x1xf32>
      tpu.vector_store %arg6[%c0_30, %c0_31, %c0_32], %37 {strides = array<i32>} : memref<1x4x1xf32, #tpu.memory_space<vmem>>, vector<1x4x1xf32>,
      %c0_33 = arith.constant 0 : index
      %c0_34 = arith.constant 0 : index
      %38 = vector.load %arg10[%c0_33, %c0_34] : memref<4x1xf32, #tpu.memory_space<vmem>>, vector<4x1xf32>
      %c0_35 = arith.constant 0 : index
      %c0_36 = arith.constant 0 : index
      %c0_37 = arith.constant 0 : index
      %39 = vector.load %arg7[%c0_35, %c0_36, %c0_37] : memref<1x4x1xf32, #tpu.memory_space<vmem>>, vector<1x4x1xf32>
      %40 = vector.shape_cast %39 : vector<1x4x1xf32> to vector<4x1xf32>
      %41 = vector.shape_cast %38 : vector<4x1xf32> to vector<1x4x1xf32>
      tpu.vector_store %arg7[%c0_35, %c0_36, %c0_37], %41 {strides = array<i32>} : memref<1x4x1xf32, #tpu.memory_space<vmem>>, vector<1x4x1xf32>,
    } else {
    }
    return
  }
  func.func @transform_0(%arg0: i32, %arg1: i32, %arg2: i32) -> (i32, i32, i32) {
    %c0_i32 = arith.constant 0 : i32
    %c0_i32_0 = arith.constant 0 : i32
    return %arg1, %c0_i32, %arg2 : i32, i32, i32
  }
  func.func @transform_1(%arg0: i32, %arg1: i32, %arg2: i32) -> (i32, i32, i32) {
    %c0_i32 = arith.constant 0 : i32
    %c0_i32_0 = arith.constant 0 : i32
    return %arg1, %c0_i32, %arg2 : i32, i32, i32
  }
  func.func @transform_2(%arg0: i32, %arg1: i32, %arg2: i32) -> (i32, i32, i32) {
    %c0_i32 = arith.constant 0 : i32
    %c0_i32_0 = arith.constant 0 : i32
    %c0_i32_1 = arith.constant 0 : i32
    return %arg0, %c0_i32, %c0_i32_0 : i32, i32, i32
  }
  func.func @transform_3(%arg0: i32, %arg1: i32, %arg2: i32) -> (i32, i32, i32) {
    %c0_i32 = arith.constant 0 : i32
    %c0_i32_0 = arith.constant 0 : i32
    %c0_i32_1 = arith.constant 0 : i32
    return %arg0, %c0_i32, %c0_i32_0 : i32, i32, i32
  }
  func.func @transform_4(%arg0: i32, %arg1: i32, %arg2: i32) -> (i32, i32, i32) {
    %c0_i32 = arith.constant 0 : i32
    %c0_i32_0 = arith.constant 0 : i32
    %c0_i32_1 = arith.constant 0 : i32
    return %arg0, %c0_i32, %c0_i32_0 : i32, i32, i32
  }
}

</mosaic_0001>

<llo_original>
// kernel: generalized_dice_loss.1
$region0: #{generalized_dice_loss.1}
  #allocation0 [shape = 'u32[]', space=smem, size = 0x4, offset = 0x4, fixed_abs, tag = 'smem constant byte address 0x4 - core index']
  #allocation1 [shape = 'u32[144,128]{1,0:T(1,128)}', space=vmem, size = 0x12000, scoped, tag = 'internal scratch']
  #allocation2 [shape = 'f32[4,1]{1,0:T(4,128)}', space=vmem, size = 0x800, scoped, tag = 'scratch operand']
  #allocation3 [shape = 'f32[4,1]{1,0:T(4,128)}', space=vmem, size = 0x800, scoped, tag = 'scratch operand']
  #allocation4 [shape = 'f32[4,1]{1,0:T(4,128)}', space=vmem, size = 0x800, scoped, tag = 'scratch operand']
  %s0 = inlined_call_operand.vmem [shape: f32[2,4,256], index: 0, kind: input, shape index: {}]
  %s1 = inlined_call_operand.vmem [shape: f32[2,4,256], index: 1, kind: input, shape index: {}]
  %s2 = inlined_call_operand.vmem [shape: f32[1,4,1], index: 2, kind: output, shape index: {0}]
  %s3 = inlined_call_operand.vmem [shape: f32[1,4,1], index: 3, kind: output, shape index: {1}]
  %s4 = inlined_call_operand.vmem [shape: f32[1,4,1], index: 4, kind: output, shape index: {2}]
  %5 = xla_tuple %s2, %s3, %s4
  %s6 = sld [smem:[#allocation0]]
  $region65: #{generalized_dice_loss.1} parent=0
    _
  %s8 = ssub.s32 1, %s6
  %s9 = scalar_select 0, %s8, %s6
  loop: start=0, step=1, limit=4
  $region2: #{generalized_dice_loss.1} parent=0 // loop_pre_header
    _
  $region3: #{generalized_dice_loss.1} parent=0 // loop_header
    %s11 = sphi 0, %s15
    %p12 = scmp.ge.s32.totalorder %s11, 4
    %s18 = sphi 0, %s37
    %s19 = sphi 0, %s33
    %s20 = sphi 0, %s29
    %s21 = sphi 0, %s18
    %s22 = sphi 0, %s19
    %s23 = sphi 0, %s20
    %s24 = sphi 0, %s21
    %s25 = sphi 0, %s22
    %s26 = sphi 0, %s23
    %s42 = sphi 0, %s44
    %s45 = sphi 0, %s42
    %s46 = sphi 0, %s45
    %s62 = sphi 0, %s46
    %s70 = sphi 0, %s72
    %s73 = sphi 0, %s70
    %s74 = sphi 0, %s73
    %s90 = sphi 0, %s74
    %s96 = sphi 0, %s98
    %s99 = sphi 0, %s96
    %s100 = sphi 0, %s99
    %s116 = sphi 0, %s100
    %s122 = sphi 0, %s124
    %s125 = sphi 0, %s122
    %s126 = sphi 0, %s125
    %s142 = sphi 0, %s126
    %s148 = sphi 0, %s150
    %s151 = sphi 0, %s148
    %s152 = sphi 0, %s151
    %s168 = sphi 0, %s152
  $region4: #{generalized_dice_loss.1} parent=0 // loop_header_branch
    %14 = sbr.rel (%p12) target = $region8
  $region5: #{generalized_dice_loss.1} parent=0 // loop_body
    %s16 = ssub.s32 %s11, 1
    %s17 = ssub.s32 %s11, 2
    %s27 = sadd.s32 1, %s20
    %p28 = scmp.ge.s32.totalorder %s27, 1
    %s29 = scalar_select %p28, 0, %s27
    %s30 = sadd.s32 1, %s19
    %s31 = scalar_select %p28, %s30, %s19
    %p32 = scmp.ge.s32.totalorder %s31, 2
    %s33 = scalar_select %p32, 0, %s31
    %s34 = sadd.s32 1, %s18
    %s35 = scalar_select %p32, %s34, %s18
    %p36 = scmp.ge.s32.totalorder %s35, 1
    %s37 = scalar_select %p36, 0, %s35
    %s38 = ssub.s32 %s19, %s33
    %s39 = ssub.s32 %s20, %s29
    %s40 = sor.u32 %s38, %s39
    %p41 = scmp.eq.s32.totalorder %s40, 0
    %s43 = sadd.s32 %s42, 1
    %s44 = scalar_select %p41, %s42, %s43
    %p47 = pneg %p41
    %p48 = scmp.eq.s32.totalorder %s11, 1
    %p49 = por %p47, %p48
    %p50 = scmp.ne.s32.totalorder %s42, %s45
    %p51 = scmp.eq.s32.totalorder %s11, 0
    %p52 = por %p50, %p51
    %p53 = scmp.ne.s32.totalorder %s42, %s45
    %p54 = scmp.eq.s32.totalorder %s16, 1
    %p55 = por %p53, %p54
    %p56 = scmp.ne.s32.totalorder %s45, %s46
    %p57 = scmp.eq.s32.totalorder %s16, 0
    %p58 = por %p56, %p57
    %p59 = scmp.ne.s32.totalorder %s45, %s46
    %p60 = scmp.eq.s32.totalorder %s17, 1
    %p61 = por %p59, %p60
    %p63 = scmp.ne.s32.totalorder %s46, %s62
    %p64 = scmp.eq.s32.totalorder %s17, 0
    %p65 = por %p63, %p64
    %s66 = ssub.s32 %s19, %s33
    %s67 = ssub.s32 %s20, %s29
    %s68 = sor.u32 %s66, %s67
    %p69 = scmp.eq.s32.totalorder %s68, 0
    %s71 = sadd.s32 %s70, 1
    %s72 = scalar_select %p69, %s70, %s71
    %p75 = pneg %p69
    %p76 = scmp.eq.s32.totalorder %s11, 1
    %p77 = por %p75, %p76
    %p78 = scmp.ne.s32.totalorder %s70, %s73
    %p79 = scmp.eq.s32.totalorder %s11, 0
    %p80 = por %p78, %p79
    %p81 = scmp.ne.s32.totalorder %s70, %s73
    %p82 = scmp.eq.s32.totalorder %s16, 1
    %p83 = por %p81, %p82
    %p84 = scmp.ne.s32.totalorder %s73, %s74
    %p85 = scmp.eq.s32.totalorder %s16, 0
    %p86 = por %p84, %p85
    %p87 = scmp.ne.s32.totalorder %s73, %s74
    %p88 = scmp.eq.s32.totalorder %s17, 1
    %p89 = por %p87, %p88
    %p91 = scmp.ne.s32.totalorder %s74, %s90
    %p92 = scmp.eq.s32.totalorder %s17, 0
    %p93 = por %p91, %p92
    %s94 = ssub.s32 %s18, %s37
    %p95 = scmp.eq.s32.totalorder %s94, 0
    %s97 = sadd.s32 %s96, 1
    %s98 = scalar_select %p95, %s96, %s97
    %p101 = pneg %p95
    %p102 = scmp.eq.s32.totalorder %s11, 1
    %p103 = por %p101, %p102
    %p104 = scmp.ne.s32.totalorder %s96, %s99
    %p105 = scmp.eq.s32.totalorder %s11, 0
    %p106 = por %p104, %p105
    %p107 = scmp.ne.s32.totalorder %s96, %s99
    %p108 = scmp.eq.s32.totalorder %s16, 1
    %p109 = por %p107, %p108
    %p110 = scmp.ne.s32.totalorder %s99, %s100
    %p111 = scmp.eq.s32.totalorder %s16, 0
    %p112 = por %p110, %p111
    %p113 = scmp.ne.s32.totalorder %s99, %s100
    %p114 = scmp.eq.s32.totalorder %s17, 1
    %p115 = por %p113, %p114
    %p117 = scmp.ne.s32.totalorder %s100, %s116
    %p118 = scmp.eq.s32.totalorder %s17, 0
    %p119 = por %p117, %p118
    %s120 = ssub.s32 %s18, %s37
    %p121 = scmp.eq.s32.totalorder %s120, 0
    %s123 = sadd.s32 %s122, 1
    %s124 = scalar_select %p121, %s122, %s123
    %p127 = pneg %p121
    %p128 = scmp.eq.s32.totalorder %s11, 1
    %p129 = por %p127, %p128
    %p130 = scmp.ne.s32.totalorder %s122, %s125
    %p131 = scmp.eq.s32.totalorder %s11, 0
    %p132 = por %p130, %p131
    %p133 = scmp.ne.s32.totalorder %s122, %s125
    %p134 = scmp.eq.s32.totalorder %s16, 1
    %p135 = por %p133, %p134
    %p136 = scmp.ne.s32.totalorder %s125, %s126
    %p137 = scmp.eq.s32.totalorder %s16, 0
    %p138 = por %p136, %p137
    %p139 = scmp.ne.s32.totalorder %s125, %s126
    %p140 = scmp.eq.s32.totalorder %s17, 1
    %p141 = por %p139, %p140
    %p143 = scmp.ne.s32.totalorder %s126, %s142
    %p144 = scmp.eq.s32.totalorder %s17, 0
    %p145 = por %p143, %p144
    %s146 = ssub.s32 %s18, %s37
    %p147 = scmp.eq.s32.totalorder %s146, 0
    %s149 = sadd.s32 %s148, 1
    %s150 = scalar_select %p147, %s148, %s149
    %p153 = pneg %p147
    %p154 = scmp.eq.s32.totalorder %s11, 1
    %p155 = por %p153, %p154
    %p156 = scmp.ne.s32.totalorder %s148, %s151
    %p157 = scmp.eq.s32.totalorder %s11, 0
    %p158 = por %p156, %p157
    %p159 = scmp.ne.s32.totalorder %s148, %s151
    %p160 = scmp.eq.s32.totalorder %s16, 1
    %p161 = por %p159, %p160
    %p162 = scmp.ne.s32.totalorder %s151, %s152
    %p163 = scmp.eq.s32.totalorder %s16, 0
    %p164 = por %p162, %p163
    %p165 = scmp.ne.s32.totalorder %s151, %s152
    %p166 = scmp.eq.s32.totalorder %s17, 1
    %p167 = por %p165, %p166
    %p169 = scmp.ne.s32.totalorder %s152, %s168
    %p170 = scmp.eq.s32.totalorder %s17, 0
    %p171 = por %p169, %p170
    %p172 = scmp.le.s32.totalorder 1, %s11
    %p173 = scmp.lt.s32.totalorder %s11, 3
    %p174 = pnand %p172, %p173
    %p175 = pneg %p174
    // Predicated region
    $region9: #{generalized_dice_loss.1} parent=5 // pred_check
      _
    $region10: #{generalized_dice_loss.1} parent=5 // pred_check_branch
      %177 = sbr.rel (%p174) target = $region12
    $region11: #{generalized_dice_loss.1} parent=5 // pred_region
      %s178 = ssub.s32 %s11, 1
    $region12: #{generalized_dice_loss.1} parent=5 // pred_fallthru
      _
    %p179 = scmp.lt.s32.totalorder %s11, 2
    // Predicated region
    $region13: #{generalized_dice_loss.1} parent=5 // pred_check
      %p180 = pneg %p179
    $region14: #{generalized_dice_loss.1} parent=5 // pred_check_branch
      %182 = sbr.rel (%p180) target = $region16
    $region15: #{generalized_dice_loss.1} parent=5 // pred_region
      // Predicated region
      $region17: #{generalized_dice_loss.1} parent=15 // pred_check
        %p183 = pneg %p52
      $region18: #{generalized_dice_loss.1} parent=15 // pred_check_branch
        %185 = sbr.rel (%p183) target = $region20
      $region19: #{generalized_dice_loss.1} parent=15 // pred_region
        %s186 = smul.u32 2, %s20
        %p187 = scmp.lt.s32.totalorder %s19, 1
        %s188 = scalar_select %p187, %s19, 1
        %p189 = scmp.lt.s32.totalorder %s186, 1
        %s190 = scalar_select %p189, %s186, 1
        %s191 = smul.addr %s188, 2
        %s192 = sadd.s32 %s190, %s191
        %s193 = smul.addr %s192, 4
        %s194 = scalar_lea.vmem %s0, %s193
        %s195 = smul.u32 2, %s20
      $region20: #{generalized_dice_loss.1} parent=15 // pred_fallthru
        _
      // Predicated region
      $region21: #{generalized_dice_loss.1} parent=15 // pred_check
        %p196 = pneg %p80
      $region22: #{generalized_dice_loss.1} parent=15 // pred_check_branch
        %198 = sbr.rel (%p196) target = $region24
      $region23: #{generalized_dice_loss.1} parent=15 // pred_region
        %s199 = smul.u32 2, %s20
        %p200 = scmp.lt.s32.totalorder %s19, 1
        %s201 = scalar_select %p200, %s19, 1
        %p202 = scmp.lt.s32.totalorder %s199, 1
        %s203 = scalar_select %p202, %s199, 1
        %s204 = smul.addr %s201, 2
        %s205 = sadd.s32 %s203, %s204
        %s206 = smul.addr %s205, 4
        %s207 = scalar_lea.vmem %s1, %s206
        %s208 = smul.u32 2, %s20
      $region24: #{generalized_dice_loss.1} parent=15 // pred_fallthru
        _
    $region16: #{generalized_dice_loss.1} parent=5 // pred_fallthru
      _
    %p209 = scmp.le.s32.totalorder 1, %s11
    %p210 = scmp.lt.s32.totalorder %s11, 3
    %p211 = pnand %p209, %p210
    %p212 = pneg %p211
    // Predicated region
    $region25: #{generalized_dice_loss.1} parent=5 // pred_check
      _
    $region26: #{generalized_dice_loss.1} parent=5 // pred_check_branch
      %214 = sbr.rel (%p211) target = $region28
    $region27: #{generalized_dice_loss.1} parent=5 // pred_region
      %s215 = ssub.s32 %s11, 1
      %s216 = smul.u32 2, %s23
      %p217 = scmp.lt.s32.totalorder %s22, 1
      %s218 = scalar_select %p217, %s22, 1
      %p219 = scmp.lt.s32.totalorder %s216, 1
      %s220 = scalar_select %p219, %s216, 1
      %s221 = smul.addr %s218, 2
      %s222 = sadd.s32 %s220, %s221
      %s223 = smul.addr %s222, 4
      %s224 = scalar_lea.vmem %s0, %s223
      %p225 = pneg %p58
      %p226 = pneg %p55
      %s227 = smul.u32 2, %s23
      %p228 = scmp.lt.s32.totalorder %s22, 1
      %s229 = scalar_select %p228, %s22, 1
      %p230 = scmp.lt.s32.totalorder %s227, 1
      %s231 = scalar_select %p230, %s227, 1
      %s232 = smul.addr %s229, 2
      %s233 = sadd.s32 %s231, %s232
      %s234 = smul.addr %s233, 4
      %s235 = scalar_lea.vmem %s1, %s234
      %p236 = pneg %p86
      %p237 = pneg %p83
      %p238 = pneg %p112
      %p239 = pneg %p109
      %p240 = scmp.lt.s32.totalorder %s21, 0
      %s241 = scalar_select %p240, %s21, 0
      %s242 = smul.addr %s241, 4
      %s243 = scalar_lea.vmem %s2, %s242
      %p244 = pneg %p138
      %p245 = pneg %p135
      %p246 = scmp.lt.s32.totalorder %s21, 0
      %s247 = scalar_select %p246, %s21, 0
      %s248 = smul.addr %s247, 4
      %s249 = scalar_lea.vmem %s3, %s248
      %p250 = pneg %p164
      %p251 = pneg %p161
      %p252 = scmp.lt.s32.totalorder %s21, 0
      %s253 = scalar_select %p252, %s21, 0
      %s254 = smul.addr %s253, 4
      %s255 = scalar_lea.vmem %s4, %s254
      %s256 = smul.u32 2, %s23
      %p257 = scmp.lt.s32.totalorder %s22, 1
      %s258 = scalar_select %p257, %s22, 1
      %p259 = scmp.lt.s32.totalorder %s256, 1
      %s260 = scalar_select %p259, %s256, 1
      %s261 = smul.addr %s258, 2
      %s262 = sadd.s32 %s260, %s261
      %s263 = smul.addr %s262, 4
      %s264 = scalar_lea.vmem %s0, %s263
      %s265 = smul.u32 2, %s23
      %s266 = smul.u32 2, %s23
      %p267 = scmp.lt.s32.totalorder %s22, 1
      %s268 = scalar_select %p267, %s22, 1
      %p269 = scmp.lt.s32.totalorder %s266, 1
      %s270 = scalar_select %p269, %s266, 1
      %s271 = smul.addr %s268, 2
      %s272 = sadd.s32 %s270, %s271
      %s273 = smul.addr %s272, 4
      %s274 = scalar_lea.vmem %s1, %s273
      %s275 = smul.u32 2, %s23
      %p276 = scmp.lt.s32.totalorder %s21, 0
      %s277 = scalar_select %p276, %s21, 0
      %s278 = smul.addr %s277, 4
      %s279 = scalar_lea.vmem %s2, %s278
      %p280 = scmp.lt.s32.totalorder %s21, 0
      %s281 = scalar_select %p280, %s21, 0
      %s282 = smul.addr %s281, 4
      %s283 = scalar_lea.vmem %s3, %s282
      %p284 = scmp.lt.s32.totalorder %s21, 0
      %s285 = scalar_select %p284, %s21, 0
      %s286 = smul.addr %s285, 4
      %s287 = scalar_lea.vmem %s4, %s286
      %p288 = scmp.eq.s32.totalorder %s22, 0
      %p289 = scmp.eq.s32.totalorder %s23, 0
      %p290 = pnand %p288, %p289
      %p291 = pneg %p290
      %p292 = scmp.eq.s32.totalorder %s22, 1
      %p293 = pnand %p292, %p289
      %p294 = pneg %p293
      // Predicated region
      $region29: #{generalized_dice_loss.1} parent=27 // pred_check
        _
      $region30: #{generalized_dice_loss.1} parent=27 // pred_check_branch
        %296 = sbr.rel (%p290) target = $region32
      $region31: #{generalized_dice_loss.1} parent=27 // pred_region
        %vm297 = vcmask 3072
        %298 = vst.msk [vmem:[#allocation2] sm:$0xf] %vm297, 0.0
        %299 = vst.msk [vmem:[#allocation3] sm:$0xf] %vm297, 0.0
        %300 = vst.msk [vmem:[#allocation4] sm:$0xf] %vm297, 0.0
      $region32: #{generalized_dice_loss.1} parent=27 // pred_fallthru
        _
      %v301 = vld [vmem:[%s264] sm:$0xff]
      %v302 = vld [vmem:[%s274] sm:$0xff]
      %v303 = vld [vmem:[#allocation2] sm:$0xf]
      %v305 = vcombine.high %v302, %v302
      %vm307 = vcmask 1043456
      %v308 = vsel %vm307, %v302, 0.0
      %v309 = vsel %vm307, %v305, 0.0
      %v310 = vadd.f32 %v308, %v309
      %311 = vadd.xlane.f32.xlu0 %v310
      %v312 = vpop.xlane.xlu0 %311
      %v313 = vadd.f32 %v303, %v312
      %vm314 = vcmask 3072
      %315 = vst.msk [vmem:[#allocation2] sm:$0xf] %vm314, %v313
      %v316 = vld [vmem:[#allocation4] sm:$0xf]
      %v318 = vcombine.high %v301, %v301
      %v320 = vsel %vm307, %v301, 0.0
      %v321 = vsel %vm307, %v318, 0.0
      %v322 = vadd.f32 %v320, %v321
      %323 = vadd.xlane.f32.xlu0 %v322
      %v324 = vpop.xlane.xlu0 %323
      %v325 = vadd.f32 %v316, %v324
      %326 = vst.msk [vmem:[#allocation4] sm:$0xf] %vm314, %v325
      %v327 = vld [vmem:[#allocation3] sm:$0xf]
      %v328 = vmul.f32 %v302, %v301
      %v330 = vcombine.high %v328, %v328
      %v332 = vsel %vm307, %v328, 0.0
      %v333 = vsel %vm307, %v330, 0.0
      %v334 = vadd.f32 %v332, %v333
      %335 = vadd.xlane.f32.xlu0 %v334
      %v336 = vpop.xlane.xlu0 %335
      %v337 = vadd.f32 %v327, %v336
      %338 = vst.msk [vmem:[#allocation3] sm:$0xf] %vm314, %v337
      // Predicated region
      $region33: #{generalized_dice_loss.1} parent=27 // pred_check
        _
      $region34: #{generalized_dice_loss.1} parent=27 // pred_check_branch
        %340 = sbr.rel (%p293) target = $region36
      $region35: #{generalized_dice_loss.1} parent=27 // pred_region
        %v341 = vld [vmem:[#allocation2] sm:$0xf]
        %342 = vst.msk [vmem:[%s279] sm:$0xf] %vm314, %v341
        %v343 = vld [vmem:[#allocation3] sm:$0xf]
        %344 = vst.msk [vmem:[%s283] sm:$0xf] %vm314, %v343
        %v345 = vld [vmem:[#allocation4] sm:$0xf]
        %346 = vst.msk [vmem:[%s287] sm:$0xf] %vm314, %v345
      $region36: #{generalized_dice_loss.1} parent=27 // pred_fallthru
        _
      %p347 = scmp.lt.s32.totalorder %s21, 0
      %s348 = scalar_select %p347, %s21, 0
      %s349 = smul.addr %s348, 4
      %s350 = scalar_lea.vmem %s2, %s349
      %p351 = scmp.lt.s32.totalorder %s21, 0
      %s352 = scalar_select %p351, %s21, 0
      %s353 = smul.addr %s352, 4
      %s354 = scalar_lea.vmem %s3, %s353
      %p355 = scmp.lt.s32.totalorder %s21, 0
      %s356 = scalar_select %p355, %s21, 0
      %s357 = smul.addr %s356, 4
      %s358 = scalar_lea.vmem %s4, %s357
      // Predicated region
      $region37: #{generalized_dice_loss.1} parent=27 // pred_check
        %p359 = pneg %p109
      $region38: #{generalized_dice_loss.1} parent=27 // pred_check_branch
        %361 = sbr.rel (%p359) target = $region40
      $region39: #{generalized_dice_loss.1} parent=27 // pred_region
        _
      $region40: #{generalized_dice_loss.1} parent=27 // pred_fallthru
        _
      // Predicated region
      $region41: #{generalized_dice_loss.1} parent=27 // pred_check
        %p362 = pneg %p135
      $region42: #{generalized_dice_loss.1} parent=27 // pred_check_branch
        %364 = sbr.rel (%p362) target = $region44
      $region43: #{generalized_dice_loss.1} parent=27 // pred_region
        _
      $region44: #{generalized_dice_loss.1} parent=27 // pred_fallthru
        _
      // Predicated region
      $region45: #{generalized_dice_loss.1} parent=27 // pred_check
        %p365 = pneg %p161
      $region46: #{generalized_dice_loss.1} parent=27 // pred_check_branch
        %367 = sbr.rel (%p365) target = $region48
      $region47: #{generalized_dice_loss.1} parent=27 // pred_region
        _
      $region48: #{generalized_dice_loss.1} parent=27 // pred_fallthru
        _
      // Predicated region
      $region49: #{generalized_dice_loss.1} parent=27 // pred_check
        %p368 = pneg %p109
      $region50: #{generalized_dice_loss.1} parent=27 // pred_check_branch
        %370 = sbr.rel (%p368) target = $region52
      $region51: #{generalized_dice_loss.1} parent=27 // pred_region
        %p371 = scmp.lt.s32.totalorder %s21, 0
        %s372 = scalar_select %p371, %s21, 0
        %s373 = smul.addr %s372, 4
        %s374 = scalar_lea.vmem %s2, %s373
      $region52: #{generalized_dice_loss.1} parent=27 // pred_fallthru
        _
      // Predicated region
      $region53: #{generalized_dice_loss.1} parent=27 // pred_check
        %p375 = pneg %p135
      $region54: #{generalized_dice_loss.1} parent=27 // pred_check_branch
        %377 = sbr.rel (%p375) target = $region56
      $region55: #{generalized_dice_loss.1} parent=27 // pred_region
        %p378 = scmp.lt.s32.totalorder %s21, 0
        %s379 = scalar_select %p378, %s21, 0
        %s380 = smul.addr %s379, 4
        %s381 = scalar_lea.vmem %s3, %s380
      $region56: #{generalized_dice_loss.1} parent=27 // pred_fallthru
        _
      // Predicated region
      $region57: #{generalized_dice_loss.1} parent=27 // pred_check
        %p382 = pneg %p161
      $region58: #{generalized_dice_loss.1} parent=27 // pred_check_branch
        %384 = sbr.rel (%p382) target = $region60
      $region59: #{generalized_dice_loss.1} parent=27 // pred_region
        %p385 = scmp.lt.s32.totalorder %s21, 0
        %s386 = scalar_select %p385, %s21, 0
        %s387 = smul.addr %s386, 4
        %s388 = scalar_lea.vmem %s4, %s387
      $region60: #{generalized_dice_loss.1} parent=27 // pred_fallthru
        _
    $region28: #{generalized_dice_loss.1} parent=5 // pred_fallthru
      _
    %p389 = scmp.le.s32.totalorder 2, %s11
    // Predicated region
    $region61: #{generalized_dice_loss.1} parent=5 // pred_check
      %p390 = pneg %p389
    $region62: #{generalized_dice_loss.1} parent=5 // pred_check_branch
      %392 = sbr.rel (%p390) target = $region64
    $region63: #{generalized_dice_loss.1} parent=5 // pred_region
      %s393 = ssub.s32 %s11, 2
    $region64: #{generalized_dice_loss.1} parent=5 // pred_fallthru
      _
  $region6: #{generalized_dice_loss.1} parent=0 // loop_footer
    %s15 = sadd.s32 1, %s11
  $region7: #{generalized_dice_loss.1} parent=0 // loop_footer_branch
    %10 = sbr.rel target = $region3
  $region8: #{generalized_dice_loss.1} parent=0 // loop_exit
    _

</llo_original>
